<compile_context>
chip_gen: v5e
topology: v5e:2x2
jax: 0.10.0
libtpu: 0.0.40
codegen_flags: <defaults>
</compile_context>

<pallas_src>
import math

import jax
import jax.numpy as jnp
from jax.experimental import pallas as pl
from jax.experimental.pallas import tpu as pltpu

LANE = 128                       # last dim maps onto the 128-lane vreg axis
TR_MAX = 8192                    # 8192 * 128 * 4 B = 4 MiB f32 block (2-D path)
BLK_ELEMS_MAX = TR_MAX * LANE    # 1,048,576 elems = 4 MiB f32 block (1-D path)
SPLIT_ROWS = 1024                # split into >= 2 blocks once >= this many rows
MIN_PALLAS_ELEMS = 65536         # below this, XLA fused elementwise is faster


def _hsigmoid_kernel(x_ref, o_ref):
    # relu6(x + 3) / 6  ==  clamp(x + 3, 0, 6) * (1/6)
    # Compute in f32 (2 VALU ops + a select ride free under the vld/vst
    # slots of this HBM-bound kernel), then cast back to the output dtype.
    x = x_ref[...].astype(jnp.float32)
    o_ref[...] = (jnp.clip(x + 3.0, 0.0, 6.0) * (1.0 / 6.0)).astype(o_ref.dtype)


def _round_up(n, m):
    return ((n + m - 1) // m) * m


def _sublane_multiple(itemsize):
    # f32 -> 8, bf16/f16 -> 16, int8/fp8 -> 32 (native sublane packing).
    return max(8, 32 // max(int(itemsize), 1))


def _pick_tile_rows(rows, sub):
    """Row tile for the (rows, 128) path: big blocks, even block count."""
    if rows <= TR_MAX:
        if rows >= SPLIT_ROWS:
            # ~2 blocks: enables load/compute/store overlap on 1-TC chips and
            # balances v7x's two TensorCores.
            return min(_round_up(pl.cdiv(rows, 2), sub), rows)
        return rows                           # single full-extent block (legal)
    nblk = pl.cdiv(rows, TR_MAX)
    nblk += nblk % 2                          # even block count -> v7x TC balance
    return min(_round_up(pl.cdiv(rows, nblk), sub), TR_MAX)


def _pick_tile_elems(total):
    """Element tile for the 1-D ragged path (multiple of 8*128 = 1024)."""
    if total <= BLK_ELEMS_MAX:
        if total >= SPLIT_ROWS * LANE:
            return min(_round_up(pl.cdiv(total, 2), 8 * LANE), total)
        return total                          # single full-extent block (legal)
    nblk = pl.cdiv(total, BLK_ELEMS_MAX)
    nblk += nblk % 2
    return min(_round_up(pl.cdiv(total, nblk), 8 * LANE), BLK_ELEMS_MAX)


def _launch(x_arr, block_shape, index_map):
    itemsize = x_arr.dtype.itemsize
    total = x_arr.size
    block_bytes = math.prod(block_shape) * itemsize
    grid = (pl.cdiv(x_arr.shape[0], block_shape[0]),)   # ragged edge masked by Pallas
    return pl.pallas_call(
        _hsigmoid_kernel,
        out_shape=jax.ShapeDtypeStruct(x_arr.shape, x_arr.dtype),
        grid_spec=pltpu.PrefetchScalarGridSpec(
            num_scalar_prefetch=0,
            grid=grid,
            in_specs=[pl.BlockSpec(block_shape, index_map)],
            out_specs=pl.BlockSpec(block_shape, index_map),
        ),
        compiler_params=pltpu.CompilerParams(
            dimension_semantics=("parallel",),
            # in + out, double-buffered, plus headroom.  Capped at 32 MiB:
            # raises v5e's 16 MiB scoped default, stays inside v6e/v7x
            # scoped defaults and well under physical VMEM everywhere.
            vmem_limit_bytes=min(32 * 1024 * 1024,
                                 max(8 * block_bytes, 4 * 1024 * 1024)),
        ),
        cost_estimate=pl.CostEstimate(
            flops=3 * total,
            transcendentals=0,
            bytes_accessed=2 * total * itemsize,
        ),
        # NOTE: input_output_aliases={0: 0} is valid here (same shape/dtype,
        # elementwise) and would halve peak HBM footprint, but only pays off
        # with caller-side buffer donation, so it is left to callers.
    )(x_arr)


def hsigmoid(x: jax.Array, *, min_pallas_elems: int = MIN_PALLAS_ELEMS) -> jax.Array:
    """Hsigmoid = relu6(x + 3) / 6 over an arbitrary-shape tensor."""
    orig_shape = x.shape
    total = x.size

    if total == 0 or total < min_pallas_elems:
        # Tiny tensors: fixed pallas_call launch cost dominates; let XLA fuse.
        return (jnp.clip(x.astype(jnp.float32) + 3.0, 0.0, 6.0)
                * (1.0 / 6.0)).astype(x.dtype)

    sub = _sublane_multiple(x.dtype.itemsize)
    if total % LANE == 0:
        # Fast path: zero-copy lane-dense (rows, 128) 2-D view.
        rows = total // LANE
        tr = _pick_tile_rows(rows, sub)
        out = _launch(x.reshape(rows, LANE), (tr, LANE), lambda i: (i, 0))
    else:
        # Ragged size: run directly on the 1-D flattened view; Pallas masks
        # the ragged tail block (no jnp.pad / trailing-slice HBM passes).
        blk = _pick_tile_elems(total)
        out = _launch(x.reshape(total), (blk,), lambda i: (i,))

    return out.reshape(orig_shape)


if __name__ == "__main__":
    key = jax.random.PRNGKey(0)
    k1, k2, k3 = jax.random.split(key, 3)

    def ref_fn(v):
        return (jnp.clip(v.astype(jnp.float32) + 3.0, 0.0, 6.0) / 6.0).astype(v.dtype)

    # NCHW activation (size % 128 == 0): 2-D lane-dense Pallas path.
    x = jax.random.normal(k1, (2, 4, 16, 16), dtype=jnp.float32) * 4.0
    out = hsigmoid(x, min_pallas_elems=0)
    jax.block_until_ready(out)
    assert out.shape == x.shape and out.dtype == x.dtype
    assert jnp.allclose(out, ref_fn(x), atol=1e-6), "mismatch (2-D kernel path)"

    # Ragged size (size % 128 != 0): 1-D ragged-edge Pallas path.
    x2 = jax.random.normal(k2, (3, 5, 7), dtype=jnp.float32) * 4.0
    out2 = hsigmoid(x2, min_pallas_elems=0)
    jax.block_until_ready(out2)
    assert out2.shape == x2.shape and out2.dtype == x2.dtype
    assert jnp.allclose(out2, ref_fn(x2), atol=1e-6), "mismatch (1-D kernel path)"

    # Tiny tensor with the default threshold: plain-JAX fallback path.
    x3 = jax.random.normal(k3, (2, 4, 8, 8), dtype=jnp.float32) * 4.0
    out3 = hsigmoid(x3)
    jax.block_until_ready(out3)
    assert out3.shape == x3.shape and out3.dtype == x3.dtype
    assert jnp.allclose(out3, ref_fn(x3), atol=1e-6), "mismatch (fallback path)"

    print("KERNEL_OK")
</pallas_src>

<mosaic_0001>
module attributes {stable_mosaic.version = 11 : i64} {
  func.func @_hsigmoid_kernel(%arg0: i32, %arg1: memref<16x128xf32, #tpu.memory_space<vmem>>, %arg2: memref<16x128xf32, #tpu.memory_space<vmem>>) attributes {dimension_semantics = [#tpu.dimension_semantics<parallel>], iteration_bounds = array<i64: 1>, scalar_prefetch = 0 : i64, scratch_operands = 0 : i64, tpu.core_type = #tpu.core_type<tc>, window_params = [{transform_indices = @transform_0, window_bounds = array<i64: 16, 128>}, {transform_indices = @transform_1, window_bounds = array<i64: 16, 128>}]} {
    %c0 = arith.constant 0 : index
    %c0_0 = arith.constant 0 : index
    %0 = vector.load %arg1[%c0, %c0_0] : memref<16x128xf32, #tpu.memory_space<vmem>>, vector<16x128xf32>
    %cst = arith.constant 3.000000e+00 : f32
    %1 = vector.broadcast %cst : f32 to vector<16x128xf32>
    %2 = arith.addf %0, %1 : vector<16x128xf32>
    %cst_1 = arith.constant 0.000000e+00 : f32
    %cst_2 = arith.constant 6.000000e+00 : f32
    %3 = vector.broadcast %cst_1 : f32 to vector<16x128xf32>
    %4 = arith.maximumf %3, %2 : vector<16x128xf32>
    %5 = vector.broadcast %cst_2 : f32 to vector<16x128xf32>
    %6 = arith.minimumf %5, %4 : vector<16x128xf32>
    %cst_3 = arith.constant 0.166666672 : f32
    %7 = vector.broadcast %cst_3 : f32 to vector<16x128xf32>
    %8 = arith.mulf %6, %7 : vector<16x128xf32>
    %c0_4 = arith.constant 0 : index
    %c0_5 = arith.constant 0 : index
    %9 = vector.load %arg2[%c0_4, %c0_5] : memref<16x128xf32, #tpu.memory_space<vmem>>, vector<16x128xf32>
    tpu.vector_store %arg2[%c0_4, %c0_5], %8 {strides = array<i32>} : memref<16x128xf32, #tpu.memory_space<vmem>>, vector<16x128xf32>,
    return
  }
  func.func @transform_0(%arg0: i32) -> (i32, i32) {
    %c0_i32 = arith.constant 0 : i32
    %c0_i32_0 = arith.constant 0 : i32
    return %arg0, %c0_i32 : i32, i32
  }
  func.func @transform_1(%arg0: i32) -> (i32, i32) {
    %c0_i32 = arith.constant 0 : i32
    %c0_i32_0 = arith.constant 0 : i32
    return %arg0, %c0_i32 : i32, i32
  }
}

</mosaic_0001>

<llo_original>
// kernel: tpu_custom_call.1
$region0: #{tpu_custom_call.1}
  #allocation0 [shape = 'u32[]', space=smem, size = 0x4, offset = 0x4, fixed_abs, tag = 'smem constant byte address 0x4 - core index']
  #allocation1 [shape = 'u32[72,128]{1,0:T(1,128)}', space=vmem, size = 0x9000, scoped, tag = 'internal scratch']
  %s0 = inlined_call_operand.hbm [shape: f32[16,128], index: 0, kind: input, shape index: {}]
  %s1 = inlined_call_operand.hbm [shape: f32[16,128], index: 1, kind: output, shape index: {}]
  %s2 = sld [smem:[#allocation0]]
  $region18: #{tpu_custom_call.1} parent=0
    _
  %s4 = ssub.s32 1, %s2
  %s5 = scalar_select 0, %s4, %s2
  $region1: #{tpu_custom_call.1} parent=0
    #allocation2 [shape = 'u8[8192]{0}', space=vmem, size = 0x2000, scoped, tag = 'input window, operand 0, single buffered']
    #allocation3 [shape = 's32[1]{0}', space=sflag, size = 0x4, scoped, tag = 'scoped memory for tpu_custom_call.1']
    #allocation4 [shape = 's32[1]{0}', space=sflag, size = 0x4, scoped, tag = 'scoped memory for tpu_custom_call.1']
    #allocation5 [shape = 'u8[8192]{0}', space=vmem, size = 0x2000, scoped, tag = 'output window, operand 0, single buffered']
    %6 = vsyncpa [#allocation3], 0
    %7 = vsyncpa [#allocation4], 0
    // Predicated region
    $region2: #{tpu_custom_call.1} parent=1 // pred_check
      _
    $region3: #{tpu_custom_call.1} parent=1 // pred_check_branch
      %9 = sbr.rel (0) target = $region5
    $region4: #{tpu_custom_call.1} parent=1 // pred_region
      %11 = vsyncadd [#allocation3], 0
      %s12 = sshll.u32 %s0, 4
      %s13 = int_to_ptr.hbm [resolvable:$true] %s12
      %s14 = sshll.u32 [#allocation2], 4
      %s15 = int_to_ptr.vmem [resolvable:$true] %s14
      %20 = dma.hbm_to_vmem [thread:$0]  %s13, 256, %s15, [#allocation3], 128, 128, 8
    $region5: #{tpu_custom_call.1} parent=1 // pred_fallthru
      _
    // Predicated region
    $region6: #{tpu_custom_call.1} parent=1 // pred_check
      _
    $region7: #{tpu_custom_call.1} parent=1 // pred_check_branch
      %22 = sbr.rel (0) target = $region9
    $region8: #{tpu_custom_call.1} parent=1 // pred_region
      %24 = dma.done [#allocation3], 256
    $region9: #{tpu_custom_call.1} parent=1 // pred_fallthru
      _
    %v25 = vld [vmem:[#allocation2] sm:$0xff]
    %v26 = vld [vmem:[#allocation2 + $0x8] sm:$0xff]
    %v27 = vadd.f32 %v25, 3.0
    %v28 = vadd.f32 %v26, 3.0
    %v29 = vmax.f32 %v27, 0.0
    %v30 = vmax.f32 %v28, 0.0
    %v31 = vmin.f32 %v29, 6.0
    %v32 = vmin.f32 %v30, 6.0
    %v33 = vmul.f32 %v31, 0.16666667
    %v34 = vmul.f32 %v32, 0.16666667
    %35 = vst [vmem:[#allocation5] sm:$0xff] %v33
    %36 = vst [vmem:[#allocation5 + $0x8] sm:$0xff] %v34
    // Predicated region
    $region10: #{tpu_custom_call.1} parent=1 // pred_check
      _
    $region11: #{tpu_custom_call.1} parent=1 // pred_check_branch
      %38 = sbr.rel (0) target = $region13
    $region12: #{tpu_custom_call.1} parent=1 // pred_region
      %40 = vsyncadd [#allocation4], 0
      %s41 = sshll.u32 [#allocation5], 4
      %s42 = int_to_ptr.vmem [resolvable:$true] %s41
      %s43 = sshll.u32 %s1, 4
      %s44 = int_to_ptr.hbm [resolvable:$true] %s43
      %49 = dma.vmem_to_hbm [thread:$0]  %s42, 256, %s44, [#allocation4], 128, 128, 8
    $region13: #{tpu_custom_call.1} parent=1 // pred_fallthru
      _
    // Predicated region
    $region14: #{tpu_custom_call.1} parent=1 // pred_check
      _
    $region15: #{tpu_custom_call.1} parent=1 // pred_check_branch
      %51 = sbr.rel (0) target = $region17
    $region16: #{tpu_custom_call.1} parent=1 // pred_region
      %53 = dma.done [#allocation4], 256
    $region17: #{tpu_custom_call.1} parent=1 // pred_fallthru
      _
    %54 = vsyncpa [#allocation3], 1
    %55 = vsyncpa [#allocation4], 1

</llo_original>
